<compile_context>
chip_gen: v7x
topology: tpu7x:2x2x1
jax: 0.10.0
libtpu: 0.0.40
codegen_flags: <defaults>
</compile_context>

<pallas_src>
import numpy as np
import jax
import jax.numpy as jnp
from jax import lax
from jax.experimental import pallas as pl
from jax.experimental.pallas import tpu as pltpu

# ---- config (mirrors config['model'] in the PyTorch module) ----
E = 8          # embedded_size (in_channels == out_channels)
K = 3          # kernel_size
S = 1          # stride
P = 1          # padding
B = 2          # batch
L = 16         # sequence length

POOL_S = 2 * S                              # MaxPool1d stride
L1_OUT = (L + 2 * P - K) // S + 1           # conv1 output length (16)
L_POOL = (L1_OUT - K) // POOL_S + 1         # maxpool output length (7)
L2P = L_POOL + 2 * P                        # conv2 zero-padded input length (9)
L2_OUT = (L2P - K) // S + 1                 # conv2 output length (7)

# static sanity: every gather below stays inside its own (per-batch) block.
assert (L1_OUT - 1) * S + (K - 1) < L + 2 * P
assert (L_POOL - 1) * POOL_S + (K - 1) < L1_OUT
assert (L2_OUT - 1) * S + (K - 1) < L2P


def _tap_gather(rows_per_b, cols_per_b, col_to_row):
    """(K, B*rows_per_b, B*cols_per_b) one-hot gather matrices, one per tap.

    g[k, b*rows + r, b*cols + c] = 1 iff col_to_row(c, k) == r (and in range).
    Out-of-range / None rows stay all-zero, so the matmul contributes an exact
    0 — that is how conv zero-padding is realized.
    """
    g = np.zeros((K, B * rows_per_b, B * cols_per_b), np.float32)
    for k in range(K):
        for b in range(B):
            for c in range(cols_per_b):
                r = col_to_row(c, k)
                if r is not None and 0 <= r < rows_per_b:
                    g[k, b * rows_per_b + r, b * cols_per_b + c] = 1.0
    return g


# constant (data-independent) shift/gather matrices, built ONCE at import time.
_S1 = _tap_gather(L, L1_OUT, lambda l, k: l * S + k - P)             # conv1 shift + pad
_SP = _tap_gather(L1_OUT, L2P,
                  lambda q, k: (q - P) * POOL_S + k
                  if P <= q < P + L_POOL else None)                  # pool stride + conv2 pad
_S2 = _tap_gather(L2P, L2_OUT, lambda l, k: l * S + k)               # conv2 shift


def cnn_kernel(x_ref, w1_ref, b1_ref, w2_ref, b2_ref,
               s1_ref, sp_ref, s2_ref, o_ref):
    f32 = jnp.float32
    cdims = (((1,), (0,)), ((), ()))   # contract lhs dim 1 with rhs dim 0

    # ---- conv1: ONE matmul mixes channels for all K taps (contract over cin) ----
    # t1[k*E + cout, b*L + l] = sum_cin W1[cout, cin, k] * x[b, l, cin]
    t1 = lax.dot_general(w1_ref[...], x_ref[...], (((1,), (1,)), ((), ())),
                         preferred_element_type=f32)                 # (K*E, B*L)

    # per-tap shift + zero-pad via constant one-hot matmuls, accumulated in f32.
    # t1[k*E:(k+1)*E] is a sublane-tile-aligned static row slice (free).
    c1 = lax.dot_general(t1[0:E, :], s1_ref[0], cdims, preferred_element_type=f32)
    for k in range(1, K):
        c1 = c1 + lax.dot_general(t1[k * E:(k + 1) * E, :], s1_ref[k], cdims,
                                  preferred_element_type=f32)
    c1 = jnp.maximum(c1 + b1_ref[...], 0.0)                          # (E, B*L1_OUT)

    # ---- MaxPool1d(K, stride=2S) + conv2 zero-padding ----
    # gather k picks window element k for every pooled column; the elementwise
    # max over the K gathers is the pooled value.  Pad columns are exactly 0.
    mpad = lax.dot_general(c1, sp_ref[0], cdims, preferred_element_type=f32)
    for k in range(1, K):
        mpad = jnp.maximum(
            mpad, lax.dot_general(c1, sp_ref[k], cdims, preferred_element_type=f32))
    # mpad: (E, B*L2P)

    # ---- conv2: same pattern as conv1 ----
    t2 = lax.dot_general(w2_ref[...], mpad, cdims,
                         preferred_element_type=f32)                 # (K*E, B*L2P)
    c2 = lax.dot_general(t2[0:E, :], s2_ref[0], cdims, preferred_element_type=f32)
    for k in range(1, K):
        c2 = c2 + lax.dot_general(t2[k * E:(k + 1) * E, :], s2_ref[k], cdims,
                                  preferred_element_type=f32)

    # single flat lane-dense store; Dropout is identity (inference mode).
    o_ref[...] = jnp.maximum(c2 + b2_ref[...], 0.0)                  # (E, B*L2_OUT)


def cnn_forward(embedding, w1, b1, w2, b2):
    """embedding: (B, L, E) f32; w*: (E, E, K) = (Cout, Cin, K); b*: (E,).

    Returns (B, E, L2_OUT), matching the PyTorch module output.
    """
    assert embedding.shape == (B, L, E), embedding.shape
    assert w1.shape == (E, E, K) and w2.shape == (E, E, K)
    assert b1.shape == (E,) and b2.shape == (E,)

    # one-time (weight-load-time) reorders, done OUTSIDE the kernel:
    x2d = embedding.reshape(B * L, E)                        # batch folded onto rows
    w1s = jnp.transpose(w1, (2, 0, 1)).reshape(K * E, E)     # stacked-tap layout
    w2s = jnp.transpose(w2, (2, 0, 1)).reshape(K * E, E)
    b1c = b1.reshape(E, 1)
    b2c = b2.reshape(E, 1)

    vmem = pl.BlockSpec(memory_space=pltpu.MemorySpace.VMEM)
    out2d = pl.pallas_call(
        cnn_kernel,
        out_shape=jax.ShapeDtypeStruct((E, B * L2_OUT), jnp.float32),
        in_specs=[vmem] * 8,
        out_specs=vmem,
    )(x2d, w1s, b1c, w2s, b2c, _S1, _SP, _S2)

    # flat (E, B*L2_OUT) slab -> (B, E, L2_OUT); trivial wrapper-side reshape.
    return jnp.transpose(out2d.reshape(E, B, L2_OUT), (1, 0, 2))


def ref_forward(embedding, w1, b1, w2, b2):
    """Pure-JAX reference mirroring the PyTorch forward (dropout = identity)."""
    x = jnp.transpose(embedding, (0, 2, 1))
    dn = ("NCH", "OIH", "NCH")
    y = lax.conv_general_dilated(x, w1, (S,), [(P, P)], dimension_numbers=dn)
    y = jax.nn.relu(y + b1[None, :, None])
    y = lax.reduce_window(y, -jnp.inf, lax.max, (1, 1, K), (1, 1, POOL_S), "VALID")
    y = lax.conv_general_dilated(y, w2, (S,), [(P, P)], dimension_numbers=dn)
    y = jax.nn.relu(y + b2[None, :, None])
    return y


if __name__ == "__main__":
    key = jax.random.PRNGKey(0)
    k_x, k_w1, k_b1, k_w2, k_b2 = jax.random.split(key, 5)

    embedding = jax.random.normal(k_x, (B, L, E), dtype=jnp.float32)
    w1 = jax.random.normal(k_w1, (E, E, K), dtype=jnp.float32) * 0.1
    b1 = jax.random.normal(k_b1, (E,), dtype=jnp.float32) * 0.1
    w2 = jax.random.normal(k_w2, (E, E, K), dtype=jnp.float32) * 0.1
    b2 = jax.random.normal(k_b2, (E,), dtype=jnp.float32) * 0.1

    out = jax.jit(cnn_forward)(embedding, w1, b1, w2, b2)
    out = jax.block_until_ready(out)

    ref = ref_forward(embedding, w1, b1, w2, b2)
    assert out.shape == (B, E, L2_OUT), out.shape
    assert jnp.allclose(out, ref, atol=1e-5, rtol=1e-5), "mismatch vs reference"

    print("KERNEL_OK")
</pallas_src>

<mosaic_0001>
module attributes {stable_mosaic.version = 11 : i64} {
  func.func @cnn_kernel(%arg0: memref<32x8xf32, #tpu.memory_space<vmem>>, %arg1: memref<24x8xf32, #tpu.memory_space<vmem>>, %arg2: memref<8x1xf32, #tpu.memory_space<vmem>>, %arg3: memref<24x8xf32, #tpu.memory_space<vmem>>, %arg4: memref<8x1xf32, #tpu.memory_space<vmem>>, %arg5: memref<3x32x32xf32, #tpu.memory_space<vmem>>, %arg6: memref<3x32x18xf32, #tpu.memory_space<vmem>>, %arg7: memref<3x18x14xf32, #tpu.memory_space<vmem>>, %arg8: memref<8x14xf32, #tpu.memory_space<vmem>>) attributes {dimension_semantics = [], scalar_prefetch = 0 : i64, scratch_operands = 0 : i64, tpu.core_type = #tpu.core_type<tc>} {
    %c0 = arith.constant 0 : index
    %c0_0 = arith.constant 0 : index
    %0 = vector.load %arg1[%c0, %c0_0] : memref<24x8xf32, #tpu.memory_space<vmem>>, vector<24x8xf32>
    %c0_1 = arith.constant 0 : index
    %c0_2 = arith.constant 0 : index
    %1 = vector.load %arg0[%c0_1, %c0_2] : memref<32x8xf32, #tpu.memory_space<vmem>>, vector<32x8xf32>
    %cst = arith.constant dense<0.000000e+00> : vector<24x32xf32>
    %2 = tpu.matmul %0, %1, %cst {dimension_numbers = #tpu.dot_dimension_numbers<[1], [1], [0], [0], [0, 0, 1, 0], [], []>} : vector<24x8xf32>, vector<32x8xf32>, vector<24x32xf32> -> vector<24x32xf32>
    %3 = vector.extract_strided_slice %2 {offsets = [0, 0], sizes = [8, 32], strides = [1, 1]} : vector<24x32xf32> to vector<8x32xf32>
    %c0_3 = arith.constant 0 : index
    %c0_4 = arith.constant 0 : index
    %c0_5 = arith.constant 0 : index
    %4 = vector.load %arg5[%c0_3, %c0_4, %c0_5] : memref<3x32x32xf32, #tpu.memory_space<vmem>>, vector<1x32x32xf32>
    %5 = vector.shape_cast %4 : vector<1x32x32xf32> to vector<32x32xf32>
    %cst_6 = arith.constant dense<0.000000e+00> : vector<8x32xf32>
    %6 = tpu.matmul %3, %5, %cst_6 {dimension_numbers = #tpu.dot_dimension_numbers<[1], [0], [0], [1], [0, 0, 1, 1], [], []>} : vector<8x32xf32>, vector<32x32xf32>, vector<8x32xf32> -> vector<8x32xf32>
    %7 = vector.extract_strided_slice %2 {offsets = [8, 0], sizes = [8, 32], strides = [1, 1]} : vector<24x32xf32> to vector<8x32xf32>
    %c1 = arith.constant 1 : index
    %c0_7 = arith.constant 0 : index
    %c0_8 = arith.constant 0 : index
    %8 = vector.load %arg5[%c1, %c0_7, %c0_8] : memref<3x32x32xf32, #tpu.memory_space<vmem>>, vector<1x32x32xf32>
    %9 = vector.shape_cast %8 : vector<1x32x32xf32> to vector<32x32xf32>
    %cst_9 = arith.constant dense<0.000000e+00> : vector<8x32xf32>
    %10 = tpu.matmul %7, %9, %cst_9 {dimension_numbers = #tpu.dot_dimension_numbers<[1], [0], [0], [1], [0, 0, 1, 1], [], []>} : vector<8x32xf32>, vector<32x32xf32>, vector<8x32xf32> -> vector<8x32xf32>
    %11 = arith.addf %6, %10 : vector<8x32xf32>
    %12 = vector.extract_strided_slice %2 {offsets = [16, 0], sizes = [8, 32], strides = [1, 1]} : vector<24x32xf32> to vector<8x32xf32>
    %c2 = arith.constant 2 : index
    %c0_10 = arith.constant 0 : index
    %c0_11 = arith.constant 0 : index
    %13 = vector.load %arg5[%c2, %c0_10, %c0_11] : memref<3x32x32xf32, #tpu.memory_space<vmem>>, vector<1x32x32xf32>
    %14 = vector.shape_cast %13 : vector<1x32x32xf32> to vector<32x32xf32>
    %cst_12 = arith.constant dense<0.000000e+00> : vector<8x32xf32>
    %15 = tpu.matmul %12, %14, %cst_12 {dimension_numbers = #tpu.dot_dimension_numbers<[1], [0], [0], [1], [0, 0, 1, 1], [], []>} : vector<8x32xf32>, vector<32x32xf32>, vector<8x32xf32> -> vector<8x32xf32>
    %16 = arith.addf %11, %15 : vector<8x32xf32>
    %c0_13 = arith.constant 0 : index
    %c0_14 = arith.constant 0 : index
    %17 = vector.load %arg2[%c0_13, %c0_14] : memref<8x1xf32, #tpu.memory_space<vmem>>, vector<8x1xf32>
    %18 = vector.broadcast %17 : vector<8x1xf32> to vector<8x32xf32>
    %19 = arith.addf %16, %18 : vector<8x32xf32>
    %cst_15 = arith.constant 0.000000e+00 : f32
    %20 = vector.broadcast %cst_15 : f32 to vector<8x32xf32>
    %21 = arith.maximumf %19, %20 : vector<8x32xf32>
    %c0_16 = arith.constant 0 : index
    %c0_17 = arith.constant 0 : index
    %c0_18 = arith.constant 0 : index
    %22 = vector.load %arg6[%c0_16, %c0_17, %c0_18] : memref<3x32x18xf32, #tpu.memory_space<vmem>>, vector<1x32x18xf32>
    %23 = vector.shape_cast %22 : vector<1x32x18xf32> to vector<32x18xf32>
    %cst_19 = arith.constant dense<0.000000e+00> : vector<8x18xf32>
    %24 = tpu.matmul %21, %23, %cst_19 {dimension_numbers = #tpu.dot_dimension_numbers<[1], [0], [0], [1], [0, 0, 1, 1], [], []>} : vector<8x32xf32>, vector<32x18xf32>, vector<8x18xf32> -> vector<8x18xf32>
    %c1_20 = arith.constant 1 : index
    %c0_21 = arith.constant 0 : index
    %c0_22 = arith.constant 0 : index
    %25 = vector.load %arg6[%c1_20, %c0_21, %c0_22] : memref<3x32x18xf32, #tpu.memory_space<vmem>>, vector<1x32x18xf32>
    %26 = vector.shape_cast %25 : vector<1x32x18xf32> to vector<32x18xf32>
    %cst_23 = arith.constant dense<0.000000e+00> : vector<8x18xf32>
    %27 = tpu.matmul %21, %26, %cst_23 {dimension_numbers = #tpu.dot_dimension_numbers<[1], [0], [0], [1], [0, 0, 1, 1], [], []>} : vector<8x32xf32>, vector<32x18xf32>, vector<8x18xf32> -> vector<8x18xf32>
    %28 = arith.maximumf %24, %27 : vector<8x18xf32>
    %c2_24 = arith.constant 2 : index
    %c0_25 = arith.constant 0 : index
    %c0_26 = arith.constant 0 : index
    %29 = vector.load %arg6[%c2_24, %c0_25, %c0_26] : memref<3x32x18xf32, #tpu.memory_space<vmem>>, vector<1x32x18xf32>
    %30 = vector.shape_cast %29 : vector<1x32x18xf32> to vector<32x18xf32>
    %cst_27 = arith.constant dense<0.000000e+00> : vector<8x18xf32>
    %31 = tpu.matmul %21, %30, %cst_27 {dimension_numbers = #tpu.dot_dimension_numbers<[1], [0], [0], [1], [0, 0, 1, 1], [], []>} : vector<8x32xf32>, vector<32x18xf32>, vector<8x18xf32> -> vector<8x18xf32>
    %32 = arith.maximumf %28, %31 : vector<8x18xf32>
    %c0_28 = arith.constant 0 : index
    %c0_29 = arith.constant 0 : index
    %33 = vector.load %arg3[%c0_28, %c0_29] : memref<24x8xf32, #tpu.memory_space<vmem>>, vector<24x8xf32>
    %cst_30 = arith.constant dense<0.000000e+00> : vector<24x18xf32>
    %34 = tpu.matmul %33, %32, %cst_30 {dimension_numbers = #tpu.dot_dimension_numbers<[1], [0], [0], [1], [0, 0, 1, 1], [], []>} : vector<24x8xf32>, vector<8x18xf32>, vector<24x18xf32> -> vector<24x18xf32>
    %35 = vector.extract_strided_slice %34 {offsets = [0, 0], sizes = [8, 18], strides = [1, 1]} : vector<24x18xf32> to vector<8x18xf32>
    %c0_31 = arith.constant 0 : index
    %c0_32 = arith.constant 0 : index
    %c0_33 = arith.constant 0 : index
    %36 = vector.load %arg7[%c0_31, %c0_32, %c0_33] : memref<3x18x14xf32, #tpu.memory_space<vmem>>, vector<1x18x14xf32>
    %37 = vector.shape_cast %36 : vector<1x18x14xf32> to vector<18x14xf32>
    %cst_34 = arith.constant dense<0.000000e+00> : vector<8x14xf32>
    %38 = tpu.matmul %35, %37, %cst_34 {dimension_numbers = #tpu.dot_dimension_numbers<[1], [0], [0], [1], [0, 0, 1, 1], [], []>} : vector<8x18xf32>, vector<18x14xf32>, vector<8x14xf32> -> vector<8x14xf32>
    %39 = vector.extract_strided_slice %34 {offsets = [8, 0], sizes = [8, 18], strides = [1, 1]} : vector<24x18xf32> to vector<8x18xf32>
    %c1_35 = arith.constant 1 : index
    %c0_36 = arith.constant 0 : index
    %c0_37 = arith.constant 0 : index
    %40 = vector.load %arg7[%c1_35, %c0_36, %c0_37] : memref<3x18x14xf32, #tpu.memory_space<vmem>>, vector<1x18x14xf32>
    %41 = vector.shape_cast %40 : vector<1x18x14xf32> to vector<18x14xf32>
    %cst_38 = arith.constant dense<0.000000e+00> : vector<8x14xf32>
    %42 = tpu.matmul %39, %41, %cst_38 {dimension_numbers = #tpu.dot_dimension_numbers<[1], [0], [0], [1], [0, 0, 1, 1], [], []>} : vector<8x18xf32>, vector<18x14xf32>, vector<8x14xf32> -> vector<8x14xf32>
    %43 = arith.addf %38, %42 : vector<8x14xf32>
    %44 = vector.extract_strided_slice %34 {offsets = [16, 0], sizes = [8, 18], strides = [1, 1]} : vector<24x18xf32> to vector<8x18xf32>
    %c2_39 = arith.constant 2 : index
    %c0_40 = arith.constant 0 : index
    %c0_41 = arith.constant 0 : index
    %45 = vector.load %arg7[%c2_39, %c0_40, %c0_41] : memref<3x18x14xf32, #tpu.memory_space<vmem>>, vector<1x18x14xf32>
    %46 = vector.shape_cast %45 : vector<1x18x14xf32> to vector<18x14xf32>
    %cst_42 = arith.constant dense<0.000000e+00> : vector<8x14xf32>
    %47 = tpu.matmul %44, %46, %cst_42 {dimension_numbers = #tpu.dot_dimension_numbers<[1], [0], [0], [1], [0, 0, 1, 1], [], []>} : vector<8x18xf32>, vector<18x14xf32>, vector<8x14xf32> -> vector<8x14xf32>
    %48 = arith.addf %43, %47 : vector<8x14xf32>
    %c0_43 = arith.constant 0 : index
    %c0_44 = arith.constant 0 : index
    %49 = vector.load %arg4[%c0_43, %c0_44] : memref<8x1xf32, #tpu.memory_space<vmem>>, vector<8x1xf32>
    %50 = vector.broadcast %49 : vector<8x1xf32> to vector<8x14xf32>
    %51 = arith.addf %48, %50 : vector<8x14xf32>
    %cst_45 = arith.constant 0.000000e+00 : f32
    %52 = vector.broadcast %cst_45 : f32 to vector<8x14xf32>
    %53 = arith.maximumf %51, %52 : vector<8x14xf32>
    %c0_46 = arith.constant 0 : index
    %c0_47 = arith.constant 0 : index
    %54 = vector.load %arg8[%c0_46, %c0_47] : memref<8x14xf32, #tpu.memory_space<vmem>>, vector<8x14xf32>
    tpu.vector_store %arg8[%c0_46, %c0_47], %53 {strides = array<i32>} : memref<8x14xf32, #tpu.memory_space<vmem>>, vector<8x14xf32>,
    return
  }
}

</mosaic_0001>

<llo_original>
// kernel: cnn_forward.1
$region0: #{cnn_forward.1}
  #allocation0 [shape = 'u32[]', space=smem, size = 0x4, offset = 0x4, fixed_abs, tag = 'smem constant byte address 0x4 - core index']
  #allocation1 [shape = 'u32[144,128]{1,0:T(1,128)}', space=vmem, size = 0x12000, scoped, tag = 'internal scratch']
  %s0 = inlined_call_operand.vmem [shape: f32[32,8], index: 0, kind: input, shape index: {}]
  %s1 = inlined_call_operand.hbm [shape: f32[24,8], index: 1, kind: input, shape index: {}]
  %s2 = inlined_call_operand.vmem [shape: f32[8,1], index: 2, kind: input, shape index: {}]
  %s3 = inlined_call_operand.hbm [shape: f32[24,8], index: 3, kind: input, shape index: {}]
  %s4 = inlined_call_operand.vmem [shape: f32[8,1], index: 4, kind: input, shape index: {}]
  %s5 = inlined_call_operand.hbm [shape: f32[3,32,32], index: 5, kind: input, shape index: {}]
  %s6 = inlined_call_operand.vmem [shape: f32[3,32,18], index: 6, kind: input, shape index: {}]
  %s7 = inlined_call_operand.hbm [shape: f32[3,18,14], index: 7, kind: input, shape index: {}]
  %s8 = inlined_call_operand.vmem [shape: f32[8,14], index: 8, kind: output, shape index: {}]
  %s9 = sld [smem:[#allocation0]]
  $region58: #{cnn_forward.1} parent=0
    _
  %s11 = ssub.s32 1, %s9
  %s12 = scalar_select 0, %s11, %s9
  $region1: #{cnn_forward.1} parent=0
    #allocation2 [shape = 'u8[12288]{0}', space=vmem, size = 0x3000, scoped, tag = 'input window, operand 1, single buffered']
    #allocation3 [shape = 's32[1]{0}', space=sflag, size = 0x4, scoped, tag = 'scoped memory for cnn_forward.1']
    #allocation4 [shape = 'u8[12288]{0}', space=vmem, size = 0x3000, scoped, tag = 'input window, operand 3, single buffered']
    #allocation5 [shape = 's32[1]{0}', space=sflag, size = 0x4, scoped, tag = 'scoped memory for cnn_forward.1']
    #allocation6 [shape = 'u8[49152]{0}', space=vmem, size = 0xc000, scoped, tag = 'input window, operand 5, single buffered']
    #allocation7 [shape = 'u8[36864]{0}', space=vmem, size = 0x9000, scoped, tag = 'input window, operand 7, single buffered']
    #allocation8 [shape = 's32[1]{0}', space=sflag, size = 0x4, scoped, tag = 'scoped memory for cnn_forward.1']
    %13 = vsyncpa [#allocation3], 0
    %14 = vsyncpa [#allocation5], 0
    %15 = vsyncpa [#allocation8], 0
    // Predicated region
    $region2: #{cnn_forward.1} parent=1 // pred_check
      _
    $region3: #{cnn_forward.1} parent=1 // pred_check_branch
      %17 = sbr.rel (0) target = $region5
    $region4: #{cnn_forward.1} parent=1 // pred_region
      _
    $region5: #{cnn_forward.1} parent=1 // pred_fallthru
      _
    // Predicated region
    $region6: #{cnn_forward.1} parent=1 // pred_check
      _
    $region7: #{cnn_forward.1} parent=1 // pred_check_branch
      %19 = sbr.rel (0) target = $region9
    $region8: #{cnn_forward.1} parent=1 // pred_region
      %s21 = ssub.s32 384, 384
      %22 = vsyncadd [#allocation3], %s21
      %s23 = sshll.u32 [#allocation2], 4
      %s24 = int_to_ptr.vmem [resolvable:$true] %s23
      %29 = dma.hbm_to_vmem [thread:$0]  %s1, 384, %s24, [#allocation3], 128, 128, 8
    $region9: #{cnn_forward.1} parent=1 // pred_fallthru
      _
    // Predicated region
    $region10: #{cnn_forward.1} parent=1 // pred_check
      _
    $region11: #{cnn_forward.1} parent=1 // pred_check_branch
      %31 = sbr.rel (0) target = $region13
    $region12: #{cnn_forward.1} parent=1 // pred_region
      _
    $region13: #{cnn_forward.1} parent=1 // pred_fallthru
      _
    // Predicated region
    $region14: #{cnn_forward.1} parent=1 // pred_check
      _
    $region15: #{cnn_forward.1} parent=1 // pred_check_branch
      %33 = sbr.rel (0) target = $region17
    $region16: #{cnn_forward.1} parent=1 // pred_region
      %s35 = ssub.s32 384, 384
      %36 = vsyncadd [#allocation5], %s35
      %s37 = sshll.u32 [#allocation4], 4
      %s38 = int_to_ptr.vmem [resolvable:$true] %s37
      %43 = dma.hbm_to_vmem [thread:$0]  %s3, 384, %s38, [#allocation5], 128, 128, 8
    $region17: #{cnn_forward.1} parent=1 // pred_fallthru
      _
    // Predicated region
    $region18: #{cnn_forward.1} parent=1 // pred_check
      _
    $region19: #{cnn_forward.1} parent=1 // pred_check_branch
      %45 = sbr.rel (0) target = $region21
    $region20: #{cnn_forward.1} parent=1 // pred_region
      _
    $region21: #{cnn_forward.1} parent=1 // pred_fallthru
      _
    // Predicated region
    $region22: #{cnn_forward.1} parent=1 // pred_check
      _
    $region23: #{cnn_forward.1} parent=1 // pred_check_branch
      %47 = sbr.rel (0) target = $region25
    $region24: #{cnn_forward.1} parent=1 // pred_region
      %s49 = ssub.s32 1536, 1536
      %50 = vsyncadd [#allocation5], %s49
      %s51 = sshll.u32 [#allocation6], 4
      %s52 = int_to_ptr.vmem [resolvable:$true] %s51
      %57 = dma.hbm_to_vmem [thread:$0]  %s5, 1536, %s52, [#allocation5], 128, 128, 8
    $region25: #{cnn_forward.1} parent=1 // pred_fallthru
      _
    // Predicated region
    $region26: #{cnn_forward.1} parent=1 // pred_check
      _
    $region27: #{cnn_forward.1} parent=1 // pred_check_branch
      %59 = sbr.rel (0) target = $region29
    $region28: #{cnn_forward.1} parent=1 // pred_region
      _
    $region29: #{cnn_forward.1} parent=1 // pred_fallthru
      _
    // Predicated region
    $region30: #{cnn_forward.1} parent=1 // pred_check
      _
    $region31: #{cnn_forward.1} parent=1 // pred_check_branch
      %61 = sbr.rel (0) target = $region33
    $region32: #{cnn_forward.1} parent=1 // pred_region
      %s63 = ssub.s32 1152, 1152
      %64 = vsyncadd [#allocation8], %s63
      %s65 = sshll.u32 [#allocation7], 4
      %s66 = int_to_ptr.vmem [resolvable:$true] %s65
      %71 = dma.hbm_to_vmem [thread:$0]  %s7, 1152, %s66, [#allocation8], 128, 128, 8
    $region33: #{cnn_forward.1} parent=1 // pred_fallthru
      _
    // Predicated region
    $region34: #{cnn_forward.1} parent=1 // pred_check
      _
    $region35: #{cnn_forward.1} parent=1 // pred_check_branch
      %73 = sbr.rel (0) target = $region37
    $region36: #{cnn_forward.1} parent=1 // pred_region
      %74 = dma.done [#allocation3], 384
    $region37: #{cnn_forward.1} parent=1 // pred_fallthru
      _
    // Predicated region
    $region38: #{cnn_forward.1} parent=1 // pred_check
      _
    $region39: #{cnn_forward.1} parent=1 // pred_check_branch
      %76 = sbr.rel (0) target = $region41
    $region40: #{cnn_forward.1} parent=1 // pred_region
      %77 = dma.done [#allocation5], 384
    $region41: #{cnn_forward.1} parent=1 // pred_fallthru
      _
    // Predicated region
    $region42: #{cnn_forward.1} parent=1 // pred_check
      _
    $region43: #{cnn_forward.1} parent=1 // pred_check_branch
      %79 = sbr.rel (0) target = $region45
    $region44: #{cnn_forward.1} parent=1 // pred_region
      %80 = dma.done [#allocation5], 1536
    $region45: #{cnn_forward.1} parent=1 // pred_fallthru
      _
    // Predicated region
    $region46: #{cnn_forward.1} parent=1 // pred_check
      _
    $region47: #{cnn_forward.1} parent=1 // pred_check_branch
      %82 = sbr.rel (0) target = $region49
    $region48: #{cnn_forward.1} parent=1 // pred_region
      %83 = dma.done [#allocation8], 1152
    $region49: #{cnn_forward.1} parent=1 // pred_fallthru
      _
    %v84 = vld [vmem:[#allocation2] sm:$0xff]
    %v85 = vld [vmem:[#allocation2 + $0x8] sm:$0xff]
    %v86 = vld [vmem:[#allocation2 + $0x10] sm:$0xff]
    %v87 = vld [vmem:[%s0] sm:$0xff]
    %v88 = vld [vmem:[%s0 + $0x8] sm:$0xff]
    %v89 = vld [vmem:[%s0 + $0x10] sm:$0xff]
    %v90 = vld [vmem:[%s0 + $0x18] sm:$0xff]
    %vm91 = vcmask 64512
    %v93 = vsel %vm91, %v84, 0
    %v96 = vsel %vm91, %v85, 0
    %v99 = vsel %vm91, %v86, 0
    %v102 = vsel %vm91, %v87, 0
    %v105 = vsel %vm91, %v88, 0
    %v108 = vsel %vm91, %v89, 0
    %v111 = vsel %vm91, %v90, 0
    %113 = vmatprep.subr.mxu0 0.0
    %114 = vmatpush1.xpose.msra.mxu0 %v102
    %115 = vmatprep.subr.mxu0 0.0
    %116 = vmatpush1.xpose.msra.mxu0 %v105
    %117 = vmatprep.subr.mxu0 0.0
    %118 = vmatpush1.xpose.msra.mxu0 %v108
    %119 = vmatprep.subr.mxu0 0.0
    %120 = vmatpush1.xpose.msra.mxu0 %v111
    %121 = vmatprep.subr.mxu0 0.0
    %122 = vmatpush1.xpose.msra.mxu0 0.0
    %123 = vmatprep.subr.mxu0 0.0
    %124 = vmatpush1.xpose.msra.mxu0 0.0
    %125 = vmatprep.subr.mxu0 0.0
    %126 = vmatpush1.xpose.msra.mxu0 0.0
    %127 = vmatprep.subr.mxu0 0.0
    %128 = vmatpush1.xpose.msra.mxu0 0.0
    %129 = vmatprep.subr.mxu0 0.0
    %130 = vmatpush1.xpose.msra.mxu0 0.0
    %131 = vmatprep.subr.mxu0 0.0
    %132 = vmatpush1.xpose.msra.mxu0 0.0
    %133 = vmatprep.subr.mxu0 0.0
    %134 = vmatpush1.xpose.msra.mxu0 0.0
    %135 = vmatprep.subr.mxu0 0.0
    %136 = vmatpush1.xpose.msra.mxu0 0.0
    %137 = vmatprep.subr.mxu0 0.0
    %138 = vmatpush1.xpose.msra.mxu0 0.0
    %139 = vmatprep.subr.mxu0 0.0
    %140 = vmatpush1.xpose.msra.mxu0 0.0
    %141 = vmatprep.subr.mxu0 0.0
    %142 = vmatpush1.xpose.msra.mxu0 0.0
    %143 = vmatprep.subr.mxu0 0.0
    %144 = vmatpush1.xpose.msra.mxu0 0.0
    %145 = vmatprep.subr.mxu0 0.0
    %146 = vmatpush1.xpose.msra.mxu0 0.0
    %147 = vmatprep.subr.mxu0 0.0
    %148 = vmatpush1.xpose.msra.mxu0 0.0
    %149 = vmatprep.subr.mxu0 0.0
    %150 = vmatpush1.xpose.msra.mxu0 0.0
    %151 = vmatprep.subr.mxu0 0.0
    %152 = vmatpush1.xpose.msra.mxu0 0.0
    %153 = vmatprep.subr.mxu0 0.0
    %154 = vmatpush1.xpose.msra.mxu0 0.0
    %155 = vmatprep.subr.mxu0 0.0
    %156 = vmatpush1.xpose.msra.mxu0 0.0
    %157 = vmatprep.subr.mxu0 0.0
    %158 = vmatpush1.xpose.msra.mxu0 0.0
    %159 = vmatprep.subr.mxu0 0.0
    %160 = vmatpush1.xpose.msra.mxu0 0.0
    %161 = vmatprep.subr.mxu0 0.0
    %162 = vmatpush1.xpose.msra.mxu0 0.0
    %163 = vmatprep.subr.mxu0 0.0
    %164 = vmatpush1.xpose.msra.mxu0 0.0
    %165 = vmatprep.subr.mxu0 0.0
    %166 = vmatpush1.xpose.msra.mxu0 0.0
    %167 = vmatprep.subr.mxu0 0.0
    %168 = vmatpush1.xpose.msra.mxu0 0.0
    %169 = vmatprep.subr.mxu0 0.0
    %170 = vmatpush1.xpose.msra.mxu0 0.0
    %171 = vmatprep.subr.mxu0 0.0
    %172 = vmatpush1.xpose.msra.mxu0 0.0
    %173 = vmatprep.subr.mxu0 0.0
    %174 = vmatpush1.xpose.msra.mxu0 0.0
    %175 = vmatprep.subr.mxu0 0.0
    %176 = vmatpush1.xpose.msra.mxu0 0.0
    %177 = vmatprep.mubr.f32.mxu0 0.0
    %178 = vmatmul.mubr.f32.gmra.mrb[0].mxu0 %v93
    %v179 = vpop.f32.mrb[0].mxu0
    %v180 = vadd.f32 0.0, %v179
    %v181 = vpop.f32.mrb[0].mxu0
    %182 = vmatprep.mubr.f32.mxu0 0.0
    %183 = vmatmul.mubr.f32.gmra.mrb[0].mxu0 %v96
    %v184 = vpop.f32.mrb[0].mxu0
    %v185 = vadd.f32 0.0, %v184
    %v186 = vpop.f32.mrb[0].mxu0
    %187 = vmatprep.mubr.f32.mxu0 0.0
    %188 = vmatmul.mubr.f32.gmra.mrb[0].mxu0 %v99
    %v189 = vpop.f32.mrb[0].mxu0
    %v190 = vadd.f32 0.0, %v189
    %v191 = vpop.f32.mrb[0].mxu0
    %192 = vdwg.mxu0
    %v193 = vld [vmem:[#allocation6] sm:$0xff]
    %v194 = vld [vmem:[#allocation6 + $0x8] sm:$0xff]
    %v195 = vld [vmem:[#allocation6 + $0x10] sm:$0xff]
    %v196 = vld [vmem:[#allocation6 + $0x18] sm:$0xff]
    %s197 = scalar_lea.vmem [#allocation6], 32
    %v198 = vld [vmem:[%s197] sm:$0xff]
    %v199 = vld [vmem:[%s197 + $0x8] sm:$0xff]
    %v200 = vld [vmem:[%s197 + $0x10] sm:$0xff]
    %v201 = vld [vmem:[%s197 + $0x18] sm:$0xff]
    %vm202 = vcmask 261120
    %v204 = vsel %vm202, %v185, 0
    %206 = vmatprep.subr.mxu0 0.0
    %207 = vmatpush1.msra.mxu0 %v198
    %208 = vmatprep.subr.mxu0 0.0
    %209 = vmatpush1.msra.mxu0 %v199
    %210 = vmatprep.subr.mxu0 0.0
    %211 = vmatpush1.msra.mxu0 %v200
    %212 = vmatprep.subr.mxu0 0.0
    %213 = vmatpush1.msra.mxu0 %v201
    %214 = vmatprep.subr.mxu0 0.0
    %215 = vmatpush1.msra.mxu0 0.0
    %216 = vmatprep.subr.mxu0 0.0
    %217 = vmatpush1.msra.mxu0 0.0
    %218 = vmatprep.subr.mxu0 0.0
    %219 = vmatpush1.msra.mxu0 0.0
    %220 = vmatprep.subr.mxu0 0.0
    %221 = vmatpush1.msra.mxu0 0.0
    %222 = vmatprep.subr.mxu0 0.0
    %223 = vmatpush1.msra.mxu0 0.0
    %224 = vmatprep.subr.mxu0 0.0
    %225 = vmatpush1.msra.mxu0 0.0
    %226 = vmatprep.subr.mxu0 0.0
    %227 = vmatpush1.msra.mxu0 0.0
    %228 = vmatprep.subr.mxu0 0.0
    %229 = vmatpush1.msra.mxu0 0.0
    %230 = vmatprep.subr.mxu0 0.0
    %231 = vmatpush1.msra.mxu0 0.0
    %232 = vmatprep.subr.mxu0 0.0
    %233 = vmatpush1.msra.mxu0 0.0
    %234 = vmatprep.subr.mxu0 0.0
    %235 = vmatpush1.msra.mxu0 0.0
    %236 = vmatprep.subr.mxu0 0.0
    %237 = vmatpush1.msra.mxu0 0.0
    %238 = vmatprep.subr.mxu0 0.0
    %239 = vmatpush1.msra.mxu0 0.0
    %240 = vmatprep.subr.mxu0 0.0
    %241 = vmatpush1.msra.mxu0 0.0
    %242 = vmatprep.subr.mxu0 0.0
    %243 = vmatpush1.msra.mxu0 0.0
    %244 = vmatprep.subr.mxu0 0.0
    %245 = vmatpush1.msra.mxu0 0.0
    %246 = vmatprep.subr.mxu0 0.0
    %247 = vmatpush1.msra.mxu0 0.0
    %248 = vmatprep.subr.mxu0 0.0
    %249 = vmatpush1.msra.mxu0 0.0
    %250 = vmatprep.subr.mxu0 0.0
    %251 = vmatpush1.msra.mxu0 0.0
    %252 = vmatprep.subr.mxu0 0.0
    %253 = vmatpush1.msra.mxu0 0.0
    %254 = vmatprep.subr.mxu0 0.0
    %255 = vmatpush1.msra.mxu0 0.0
    %256 = vmatprep.subr.mxu0 0.0
    %257 = vmatpush1.msra.mxu0 0.0
    %258 = vmatprep.subr.mxu0 0.0
    %259 = vmatpush1.msra.mxu0 0.0
    %260 = vmatprep.subr.mxu0 0.0
    %261 = vmatpush1.msra.mxu0 0.0
    %262 = vmatprep.subr.mxu0 0.0
    %263 = vmatpush1.msra.mxu0 0.0
    %264 = vmatprep.subr.mxu0 0.0
    %265 = vmatpush1.msra.mxu0 0.0
    %266 = vmatprep.subr.mxu0 0.0
    %267 = vmatpush1.msra.mxu0 0.0
    %268 = vmatprep.subr.mxu0 0.0
    %269 = vmatpush1.msra.mxu0 0.0
    %270 = vmatprep.mubr.f32.mxu0 0.0
    %271 = vmatmul.mubr.f32.gmra.mrb[0].mxu0 %v204
    %v272 = vpop.f32.mrb[0].mxu0
    %v273 = vadd.f32 0.0, %v272
    %v274 = vpop.f32.mrb[0].mxu0
    %275 = vdwg.mxu0
    %v277 = vsel %vm202, %v180, 0
    %279 = vmatprep.subr.mxu0 0.0
    %280 = vmatpush1.msra.mxu0 %v193
    %281 = vmatprep.subr.mxu0 0.0
    %282 = vmatpush1.msra.mxu0 %v194
    %283 = vmatprep.subr.mxu0 0.0
    %284 = vmatpush1.msra.mxu0 %v195
    %285 = vmatprep.subr.mxu0 0.0
    %286 = vmatpush1.msra.mxu0 %v196
    %287 = vmatprep.subr.mxu0 0.0
    %288 = vmatpush1.msra.mxu0 0.0
    %289 = vmatprep.subr.mxu0 0.0
    %290 = vmatpush1.msra.mxu0 0.0
    %291 = vmatprep.subr.mxu0 0.0
    %292 = vmatpush1.msra.mxu0 0.0
    %293 = vmatprep.subr.mxu0 0.0
    %294 = vmatpush1.msra.mxu0 0.0
    %295 = vmatprep.subr.mxu0 0.0
    %296 = vmatpush1.msra.mxu0 0.0
    %297 = vmatprep.subr.mxu0 0.0
    %298 = vmatpush1.msra.mxu0 0.0
    %299 = vmatprep.subr.mxu0 0.0
    %300 = vmatpush1.msra.mxu0 0.0
    %301 = vmatprep.subr.mxu0 0.0
    %302 = vmatpush1.msra.mxu0 0.0
    %303 = vmatprep.subr.mxu0 0.0
    %304 = vmatpush1.msra.mxu0 0.0
    %305 = vmatprep.subr.mxu0 0.0
    %306 = vmatpush1.msra.mxu0 0.0
    %307 = vmatprep.subr.mxu0 0.0
    %308 = vmatpush1.msra.mxu0 0.0
    %309 = vmatprep.subr.mxu0 0.0
    %310 = vmatpush1.msra.mxu0 0.0
    %311 = vmatprep.subr.mxu0 0.0
    %312 = vmatpush1.msra.mxu0 0.0
    %313 = vmatprep.subr.mxu0 0.0
    %314 = vmatpush1.msra.mxu0 0.0
    %315 = vmatprep.subr.mxu0 0.0
    %316 = vmatpush1.msra.mxu0 0.0
    %317 = vmatprep.subr.mxu0 0.0
    %318 = vmatpush1.msra.mxu0 0.0
    %319 = vmatprep.subr.mxu0 0.0
    %320 = vmatpush1.msra.mxu0 0.0
    %321 = vmatprep.subr.mxu0 0.0
    %322 = vmatpush1.msra.mxu0 0.0
    %323 = vmatprep.subr.mxu0 0.0
    %324 = vmatpush1.msra.mxu0 0.0
    %325 = vmatprep.subr.mxu0 0.0
    %326 = vmatpush1.msra.mxu0 0.0
    %327 = vmatprep.subr.mxu0 0.0
    %328 = vmatpush1.msra.mxu0 0.0
    %329 = vmatprep.subr.mxu0 0.0
    %330 = vmatpush1.msra.mxu0 0.0
    %331 = vmatprep.subr.mxu0 0.0
    %332 = vmatpush1.msra.mxu0 0.0
    %333 = vmatprep.subr.mxu0 0.0
    %334 = vmatpush1.msra.mxu0 0.0
    %335 = vmatprep.subr.mxu0 0.0
    %336 = vmatpush1.msra.mxu0 0.0
    %337 = vmatprep.subr.mxu0 0.0
    %338 = vmatpush1.msra.mxu0 0.0
    %339 = vmatprep.subr.mxu0 0.0
    %340 = vmatpush1.msra.mxu0 0.0
    %341 = vmatprep.subr.mxu0 0.0
    %342 = vmatpush1.msra.mxu0 0.0
    %343 = vmatprep.mubr.f32.mxu0 0.0
    %344 = vmatmul.mubr.f32.gmra.mrb[0].mxu0 %v277
    %v345 = vpop.f32.mrb[0].mxu0
    %v346 = vadd.f32 %v273, %v345
    %v347 = vpop.f32.mrb[0].mxu0
    %348 = vdwg.mxu0
    %s349 = scalar_lea.vmem [#allocation6], 64
    %v350 = vld [vmem:[%s349] sm:$0xff]
    %v351 = vld [vmem:[%s349 + $0x8] sm:$0xff]
    %v352 = vld [vmem:[%s349 + $0x10] sm:$0xff]
    %v353 = vld [vmem:[%s349 + $0x18] sm:$0xff]
    %v355 = vsel %vm202, %v190, 0
    %357 = vmatprep.subr.mxu0 0.0
    %358 = vmatpush1.msra.mxu0 %v350
    %359 = vmatprep.subr.mxu0 0.0
    %360 = vmatpush1.msra.mxu0 %v351
    %361 = vmatprep.subr.mxu0 0.0
    %362 = vmatpush1.msra.mxu0 %v352
    %363 = vmatprep.subr.mxu0 0.0
    %364 = vmatpush1.msra.mxu0 %v353
    %365 = vmatprep.subr.mxu0 0.0
    %366 = vmatpush1.msra.mxu0 0.0
    %367 = vmatprep.subr.mxu0 0.0
    %368 = vmatpush1.msra.mxu0 0.0
    %369 = vmatprep.subr.mxu0 0.0
    %370 = vmatpush1.msra.mxu0 0.0
    %371 = vmatprep.subr.mxu0 0.0
    %372 = vmatpush1.msra.mxu0 0.0
    %373 = vmatprep.subr.mxu0 0.0
    %374 = vmatpush1.msra.mxu0 0.0
    %375 = vmatprep.subr.mxu0 0.0
    %376 = vmatpush1.msra.mxu0 0.0
    %377 = vmatprep.subr.mxu0 0.0
    %378 = vmatpush1.msra.mxu0 0.0
    %379 = vmatprep.subr.mxu0 0.0
    %380 = vmatpush1.msra.mxu0 0.0
    %381 = vmatprep.subr.mxu0 0.0
    %382 = vmatpush1.msra.mxu0 0.0
    %383 = vmatprep.subr.mxu0 0.0
    %384 = vmatpush1.msra.mxu0 0.0
    %385 = vmatprep.subr.mxu0 0.0
    %386 = vmatpush1.msra.mxu0 0.0
    %387 = vmatprep.subr.mxu0 0.0
    %388 = vmatpush1.msra.mxu0 0.0
    %389 = vmatprep.subr.mxu0 0.0
    %390 = vmatpush1.msra.mxu0 0.0
    %391 = vmatprep.subr.mxu0 0.0
    %392 = vmatpush1.msra.mxu0 0.0
    %393 = vmatprep.subr.mxu0 0.0
    %394 = vmatpush1.msra.mxu0 0.0
    %395 = vmatprep.subr.mxu0 0.0
    %396 = vmatpush1.msra.mxu0 0.0
    %397 = vmatprep.subr.mxu0 0.0
    %398 = vmatpush1.msra.mxu0 0.0
    %399 = vmatprep.subr.mxu0 0.0
    %400 = vmatpush1.msra.mxu0 0.0
    %401 = vmatprep.subr.mxu0 0.0
    %402 = vmatpush1.msra.mxu0 0.0
    %403 = vmatprep.subr.mxu0 0.0
    %404 = vmatpush1.msra.mxu0 0.0
    %405 = vmatprep.subr.mxu0 0.0
    %406 = vmatpush1.msra.mxu0 0.0
    %407 = vmatprep.subr.mxu0 0.0
    %408 = vmatpush1.msra.mxu0 0.0
    %409 = vmatprep.subr.mxu0 0.0
    %410 = vmatpush1.msra.mxu0 0.0
    %411 = vmatprep.subr.mxu0 0.0
    %412 = vmatpush1.msra.mxu0 0.0
    %413 = vmatprep.subr.mxu0 0.0
    %414 = vmatpush1.msra.mxu0 0.0
    %415 = vmatprep.subr.mxu0 0.0
    %416 = vmatpush1.msra.mxu0 0.0
    %417 = vmatprep.subr.mxu0 0.0
    %418 = vmatpush1.msra.mxu0 0.0
    %419 = vmatprep.subr.mxu0 0.0
    %420 = vmatpush1.msra.mxu0 0.0
    %421 = vmatprep.mubr.f32.mxu0 0.0
    %422 = vmatmul.mubr.f32.gmra.mrb[0].mxu0 %v355
    %v423 = vpop.f32.mrb[0].mxu0
    %v424 = vadd.f32 0.0, %v423
    %v425 = vpop.f32.mrb[0].mxu0
    %426 = vdwg.mxu0
    %v427 = vadd.f32 %v346, %v424
    %v428 = vld [vmem:[%s2] sm:$0xff]
    %430 = vset.pattern.permute.xlu0 0
    %431 = vperm.xlu0 %430, %v428
    %v432 = vpop.permute.xlu0 %431
    %v434 = vadd.f32 %v427, %v432
    %v435 = vmax.f32 %v434, 0.0
    %v436 = vld [vmem:[%s6] sm:$0xff]
    %v437 = vld [vmem:[%s6 + $0x8] sm:$0xff]
    %v438 = vld [vmem:[%s6 + $0x10] sm:$0xff]
    %v439 = vld [vmem:[%s6 + $0x18] sm:$0xff]
    %v441 = vsel %vm202, %v435, 0
    %443 = vmatprep.subr.mxu0 0.0
    %444 = vmatpush1.msra.mxu0 %v436
    %445 = vmatprep.subr.mxu0 0.0
    %446 = vmatpush1.msra.mxu0 %v437
    %447 = vmatprep.subr.mxu0 0.0
    %448 = vmatpush1.msra.mxu0 %v438
    %449 = vmatprep.subr.mxu0 0.0
    %450 = vmatpush1.msra.mxu0 %v439
    %451 = vmatprep.subr.mxu0 0.0
    %452 = vmatpush1.msra.mxu0 0.0
    %453 = vmatprep.subr.mxu0 0.0
    %454 = vmatpush1.msra.mxu0 0.0
    %455 = vmatprep.subr.mxu0 0.0
    %456 = vmatpush1.msra.mxu0 0.0
    %457 = vmatprep.subr.mxu0 0.0
    %458 = vmatpush1.msra.mxu0 0.0
    %459 = vmatprep.subr.mxu0 0.0
    %460 = vmatpush1.msra.mxu0 0.0
    %461 = vmatprep.subr.mxu0 0.0
    %462 = vmatpush1.msra.mxu0 0.0
    %463 = vmatprep.subr.mxu0 0.0
    %464 = vmatpush1.msra.mxu0 0.0
    %465 = vmatprep.subr.mxu0 0.0
    %466 = vmatpush1.msra.mxu0 0.0
    %467 = vmatprep.subr.mxu0 0.0
    %468 = vmatpush1.msra.mxu0 0.0
    %469 = vmatprep.subr.mxu0 0.0
    %470 = vmatpush1.msra.mxu0 0.0
    %471 = vmatprep.subr.mxu0 0.0
    %472 = vmatpush1.msra.mxu0 0.0
    %473 = vmatprep.subr.mxu0 0.0
    %474 = vmatpush1.msra.mxu0 0.0
    %475 = vmatprep.subr.mxu0 0.0
    %476 = vmatpush1.msra.mxu0 0.0
    %477 = vmatprep.subr.mxu0 0.0
    %478 = vmatpush1.msra.mxu0 0.0
    %479 = vmatprep.subr.mxu0 0.0
    %480 = vmatpush1.msra.mxu0 0.0
    %481 = vmatprep.subr.mxu0 0.0
    %482 = vmatpush1.msra.mxu0 0.0
    %483 = vmatprep.subr.mxu0 0.0
    %484 = vmatpush1.msra.mxu0 0.0
    %485 = vmatprep.subr.mxu0 0.0
    %486 = vmatpush1.msra.mxu0 0.0
    %487 = vmatprep.subr.mxu0 0.0
    %488 = vmatpush1.msra.mxu0 0.0
    %489 = vmatprep.subr.mxu0 0.0
    %490 = vmatpush1.msra.mxu0 0.0
    %491 = vmatprep.subr.mxu0 0.0
    %492 = vmatpush1.msra.mxu0 0.0
    %493 = vmatprep.subr.mxu0 0.0
    %494 = vmatpush1.msra.mxu0 0.0
    %495 = vmatprep.subr.mxu0 0.0
    %496 = vmatpush1.msra.mxu0 0.0
    %497 = vmatprep.subr.mxu0 0.0
    %498 = vmatpush1.msra.mxu0 0.0
    %499 = vmatprep.subr.mxu0 0.0
    %500 = vmatpush1.msra.mxu0 0.0
    %501 = vmatprep.subr.mxu0 0.0
    %502 = vmatpush1.msra.mxu0 0.0
    %503 = vmatprep.subr.mxu0 0.0
    %504 = vmatpush1.msra.mxu0 0.0
    %505 = vmatprep.subr.mxu0 0.0
    %506 = vmatpush1.msra.mxu0 0.0
    %507 = vmatprep.mubr.f32.mxu0 0.0
    %508 = vmatmul.mubr.f32.gmra.mrb[0].mxu0 %v441
    %v509 = vpop.f32.mrb[0].mxu0
    %v510 = vadd.f32 0.0, %v509
    %v511 = vpop.f32.mrb[0].mxu0
    %512 = vdwg.mxu0
    %s513 = scalar_lea.vmem %s6, 32
    %v514 = vld [vmem:[%s513] sm:$0xff]
    %v515 = vld [vmem:[%s513 + $0x8] sm:$0xff]
    %v516 = vld [vmem:[%s513 + $0x10] sm:$0xff]
    %v517 = vld [vmem:[%s513 + $0x18] sm:$0xff]
    %518 = vmatprep.subr.mxu0 0.0
    %519 = vmatpush1.msra.mxu0 %v514
    %520 = vmatprep.subr.mxu0 0.0
    %521 = vmatpush1.msra.mxu0 %v515
    %522 = vmatprep.subr.mxu0 0.0
    %523 = vmatpush1.msra.mxu0 %v516
    %524 = vmatprep.subr.mxu0 0.0
    %525 = vmatpush1.msra.mxu0 %v517
    %526 = vmatprep.subr.mxu0 0.0
    %527 = vmatpush1.msra.mxu0 0.0
    %528 = vmatprep.subr.mxu0 0.0
    %529 = vmatpush1.msra.mxu0 0.0
    %530 = vmatprep.subr.mxu0 0.0
    %531 = vmatpush1.msra.mxu0 0.0
    %532 = vmatprep.subr.mxu0 0.0
    %533 = vmatpush1.msra.mxu0 0.0
    %534 = vmatprep.subr.mxu0 0.0
    %535 = vmatpush1.msra.mxu0 0.0
    %536 = vmatprep.subr.mxu0 0.0
    %537 = vmatpush1.msra.mxu0 0.0
    %538 = vmatprep.subr.mxu0 0.0
    %539 = vmatpush1.msra.mxu0 0.0
    %540 = vmatprep.subr.mxu0 0.0
    %541 = vmatpush1.msra.mxu0 0.0
    %542 = vmatprep.subr.mxu0 0.0
    %543 = vmatpush1.msra.mxu0 0.0
    %544 = vmatprep.subr.mxu0 0.0
    %545 = vmatpush1.msra.mxu0 0.0
    %546 = vmatprep.subr.mxu0 0.0
    %547 = vmatpush1.msra.mxu0 0.0
    %548 = vmatprep.subr.mxu0 0.0
    %549 = vmatpush1.msra.mxu0 0.0
    %550 = vmatprep.subr.mxu0 0.0
    %551 = vmatpush1.msra.mxu0 0.0
    %552 = vmatprep.subr.mxu0 0.0
    %553 = vmatpush1.msra.mxu0 0.0
    %554 = vmatprep.subr.mxu0 0.0
    %555 = vmatpush1.msra.mxu0 0.0
    %556 = vmatprep.subr.mxu0 0.0
    %557 = vmatpush1.msra.mxu0 0.0
    %558 = vmatprep.subr.mxu0 0.0
    %559 = vmatpush1.msra.mxu0 0.0
    %560 = vmatprep.subr.mxu0 0.0
    %561 = vmatpush1.msra.mxu0 0.0
    %562 = vmatprep.subr.mxu0 0.0
    %563 = vmatpush1.msra.mxu0 0.0
    %564 = vmatprep.subr.mxu0 0.0
    %565 = vmatpush1.msra.mxu0 0.0
    %566 = vmatprep.subr.mxu0 0.0
    %567 = vmatpush1.msra.mxu0 0.0
    %568 = vmatprep.subr.mxu0 0.0
    %569 = vmatpush1.msra.mxu0 0.0
    %570 = vmatprep.subr.mxu0 0.0
    %571 = vmatpush1.msra.mxu0 0.0
    %572 = vmatprep.subr.mxu0 0.0
    %573 = vmatpush1.msra.mxu0 0.0
    %574 = vmatprep.subr.mxu0 0.0
    %575 = vmatpush1.msra.mxu0 0.0
    %576 = vmatprep.subr.mxu0 0.0
    %577 = vmatpush1.msra.mxu0 0.0
    %578 = vmatprep.subr.mxu0 0.0
    %579 = vmatpush1.msra.mxu0 0.0
    %580 = vmatprep.subr.mxu0 0.0
    %581 = vmatpush1.msra.mxu0 0.0
    %582 = vmatprep.mubr.f32.mxu0 0.0
    %583 = vmatmul.mubr.f32.gmra.mrb[0].mxu0 %v441
    %v584 = vpop.f32.mrb[0].mxu0
    %v585 = vadd.f32 0.0, %v584
    %v586 = vpop.f32.mrb[0].mxu0
    %587 = vdwg.mxu0
    %v588 = vmax.f32 %v510, %v585
    %s589 = scalar_lea.vmem %s6, 64
    %v590 = vld [vmem:[%s589] sm:$0xff]
    %v591 = vld [vmem:[%s589 + $0x8] sm:$0xff]
    %v592 = vld [vmem:[%s589 + $0x10] sm:$0xff]
    %v593 = vld [vmem:[%s589 + $0x18] sm:$0xff]
    %594 = vmatprep.subr.mxu0 0.0
    %595 = vmatpush1.msra.mxu0 %v590
    %596 = vmatprep.subr.mxu0 0.0
    %597 = vmatpush1.msra.mxu0 %v591
    %598 = vmatprep.subr.mxu0 0.0
    %599 = vmatpush1.msra.mxu0 %v592
    %600 = vmatprep.subr.mxu0 0.0
    %601 = vmatpush1.msra.mxu0 %v593
    %602 = vmatprep.subr.mxu0 0.0
    %603 = vmatpush1.msra.mxu0 0.0
    %604 = vmatprep.subr.mxu0 0.0
    %605 = vmatpush1.msra.mxu0 0.0
    %606 = vmatprep.subr.mxu0 0.0
    %607 = vmatpush1.msra.mxu0 0.0
    %608 = vmatprep.subr.mxu0 0.0
    %609 = vmatpush1.msra.mxu0 0.0
    %610 = vmatprep.subr.mxu0 0.0
    %611 = vmatpush1.msra.mxu0 0.0
    %612 = vmatprep.subr.mxu0 0.0
    %613 = vmatpush1.msra.mxu0 0.0
    %614 = vmatprep.subr.mxu0 0.0
    %615 = vmatpush1.msra.mxu0 0.0
    %616 = vmatprep.subr.mxu0 0.0
    %617 = vmatpush1.msra.mxu0 0.0
    %618 = vmatprep.subr.mxu0 0.0
    %619 = vmatpush1.msra.mxu0 0.0
    %620 = vmatprep.subr.mxu0 0.0
    %621 = vmatpush1.msra.mxu0 0.0
    %622 = vmatprep.subr.mxu0 0.0
    %623 = vmatpush1.msra.mxu0 0.0
    %624 = vmatprep.subr.mxu0 0.0
    %625 = vmatpush1.msra.mxu0 0.0
    %626 = vmatprep.subr.mxu0 0.0
    %627 = vmatpush1.msra.mxu0 0.0
    %628 = vmatprep.subr.mxu0 0.0
    %629 = vmatpush1.msra.mxu0 0.0
    %630 = vmatprep.subr.mxu0 0.0
    %631 = vmatpush1.msra.mxu0 0.0
    %632 = vmatprep.subr.mxu0 0.0
    %633 = vmatpush1.msra.mxu0 0.0
    %634 = vmatprep.subr.mxu0 0.0
    %635 = vmatpush1.msra.mxu0 0.0
    %636 = vmatprep.subr.mxu0 0.0
    %637 = vmatpush1.msra.mxu0 0.0
    %638 = vmatprep.subr.mxu0 0.0
    %639 = vmatpush1.msra.mxu0 0.0
    %640 = vmatprep.subr.mxu0 0.0
    %641 = vmatpush1.msra.mxu0 0.0
    %642 = vmatprep.subr.mxu0 0.0
    %643 = vmatpush1.msra.mxu0 0.0
    %644 = vmatprep.subr.mxu0 0.0
    %645 = vmatpush1.msra.mxu0 0.0
    %646 = vmatprep.subr.mxu0 0.0
    %647 = vmatpush1.msra.mxu0 0.0
    %648 = vmatprep.subr.mxu0 0.0
    %649 = vmatpush1.msra.mxu0 0.0
    %650 = vmatprep.subr.mxu0 0.0
    %651 = vmatpush1.msra.mxu0 0.0
    %652 = vmatprep.subr.mxu0 0.0
    %653 = vmatpush1.msra.mxu0 0.0
    %654 = vmatprep.subr.mxu0 0.0
    %655 = vmatpush1.msra.mxu0 0.0
    %656 = vmatprep.subr.mxu0 0.0
    %657 = vmatpush1.msra.mxu0 0.0
    %658 = vmatprep.mubr.f32.mxu0 0.0
    %659 = vmatmul.mubr.f32.gmra.mrb[0].mxu0 %v441
    %v660 = vpop.f32.mrb[0].mxu0
    %v661 = vadd.f32 0.0, %v660
    %v662 = vpop.f32.mrb[0].mxu0
    %663 = vdwg.mxu0
    %v664 = vmax.f32 %v588, %v661
    %v665 = vld [vmem:[#allocation4] sm:$0xff]
    %v666 = vld [vmem:[#allocation4 + $0x8] sm:$0xff]
    %v667 = vld [vmem:[#allocation4 + $0x10] sm:$0xff]
    %v669 = vsel %vm91, %v665, 0
    %v672 = vsel %vm91, %v666, 0
    %v675 = vsel %vm91, %v667, 0
    %677 = vmatprep.subr.mxu0 0.0
    %678 = vmatpush1.msra.mxu0 %v664
    %679 = vmatprep.subr.mxu0 0.0
    %680 = vmatpush1.msra.mxu0 0.0
    %681 = vmatprep.subr.mxu0 0.0
    %682 = vmatpush1.msra.mxu0 0.0
    %683 = vmatprep.subr.mxu0 0.0
    %684 = vmatpush1.msra.mxu0 0.0
    %685 = vmatprep.subr.mxu0 0.0
    %686 = vmatpush1.msra.mxu0 0.0
    %687 = vmatprep.subr.mxu0 0.0
    %688 = vmatpush1.msra.mxu0 0.0
    %689 = vmatprep.subr.mxu0 0.0
    %690 = vmatpush1.msra.mxu0 0.0
    %691 = vmatprep.subr.mxu0 0.0
    %692 = vmatpush1.msra.mxu0 0.0
    %693 = vmatprep.subr.mxu0 0.0
    %694 = vmatpush1.msra.mxu0 0.0
    %695 = vmatprep.subr.mxu0 0.0
    %696 = vmatpush1.msra.mxu0 0.0
    %697 = vmatprep.subr.mxu0 0.0
    %698 = vmatpush1.msra.mxu0 0.0
    %699 = vmatprep.subr.mxu0 0.0
    %700 = vmatpush1.msra.mxu0 0.0
    %701 = vmatprep.subr.mxu0 0.0
    %702 = vmatpush1.msra.mxu0 0.0
    %703 = vmatprep.subr.mxu0 0.0
    %704 = vmatpush1.msra.mxu0 0.0
    %705 = vmatprep.subr.mxu0 0.0
    %706 = vmatpush1.msra.mxu0 0.0
    %707 = vmatprep.subr.mxu0 0.0
    %708 = vmatpush1.msra.mxu0 0.0
    %709 = vmatprep.subr.mxu0 0.0
    %710 = vmatpush1.msra.mxu0 0.0
    %711 = vmatprep.subr.mxu0 0.0
    %712 = vmatpush1.msra.mxu0 0.0
    %713 = vmatprep.subr.mxu0 0.0
    %714 = vmatpush1.msra.mxu0 0.0
    %715 = vmatprep.subr.mxu0 0.0
    %716 = vmatpush1.msra.mxu0 0.0
    %717 = vmatprep.subr.mxu0 0.0
    %718 = vmatpush1.msra.mxu0 0.0
    %719 = vmatprep.subr.mxu0 0.0
    %720 = vmatpush1.msra.mxu0 0.0
    %721 = vmatprep.subr.mxu0 0.0
    %722 = vmatpush1.msra.mxu0 0.0
    %723 = vmatprep.subr.mxu0 0.0
    %724 = vmatpush1.msra.mxu0 0.0
    %725 = vmatprep.subr.mxu0 0.0
    %726 = vmatpush1.msra.mxu0 0.0
    %727 = vmatprep.subr.mxu0 0.0
    %728 = vmatpush1.msra.mxu0 0.0
    %729 = vmatprep.subr.mxu0 0.0
    %730 = vmatpush1.msra.mxu0 0.0
    %731 = vmatprep.subr.mxu0 0.0
    %732 = vmatpush1.msra.mxu0 0.0
    %733 = vmatprep.subr.mxu0 0.0
    %734 = vmatpush1.msra.mxu0 0.0
    %735 = vmatprep.subr.mxu0 0.0
    %736 = vmatpush1.msra.mxu0 0.0
    %737 = vmatprep.subr.mxu0 0.0
    %738 = vmatpush1.msra.mxu0 0.0
    %739 = vmatprep.subr.mxu0 0.0
    %740 = vmatpush1.msra.mxu0 0.0
    %741 = vmatprep.mubr.f32.mxu0 0.0
    %742 = vmatmul.mubr.f32.gmra.mrb[0].mxu0 %v669
    %v743 = vpop.f32.mrb[0].mxu0
    %v744 = vadd.f32 0.0, %v743
    %v745 = vpop.f32.mrb[0].mxu0
    %746 = vmatprep.mubr.f32.mxu0 0.0
    %747 = vmatmul.mubr.f32.gmra.mrb[0].mxu0 %v672
    %v748 = vpop.f32.mrb[0].mxu0
    %v749 = vadd.f32 0.0, %v748
    %v750 = vpop.f32.mrb[0].mxu0
    %751 = vmatprep.mubr.f32.mxu0 0.0
    %752 = vmatmul.mubr.f32.gmra.mrb[0].mxu0 %v675
    %v753 = vpop.f32.mrb[0].mxu0
    %v754 = vadd.f32 0.0, %v753
    %v755 = vpop.f32.mrb[0].mxu0
    %756 = vdwg.mxu0
    %v757 = vld [vmem:[#allocation7] sm:$0xff]
    %v758 = vld [vmem:[#allocation7 + $0x8] sm:$0xff]
    %v759 = vld [vmem:[#allocation7 + $0x10] sm:$0x3]
    %s760 = scalar_lea.vmem [#allocation7], 24
    %v761 = vld [vmem:[%s760] sm:$0xff]
    %v762 = vld [vmem:[%s760 + $0x8] sm:$0xff]
    %v763 = vld [vmem:[%s760 + $0x10] sm:$0x3]
    %vm764 = vcmask 146432
    %v766 = vsel %vm764, %v749, 0
    %vm768 = vcmask 1041408
    %v770 = vsel %vm768, %v763, 0
    %772 = vmatprep.subr.mxu0 0.0
    %773 = vmatpush1.msra.mxu0 %v761
    %774 = vmatprep.subr.mxu0 0.0
    %775 = vmatpush1.msra.mxu0 %v762
    %776 = vmatprep.subr.mxu0 0.0
    %777 = vmatpush1.msra.mxu0 %v770
    %778 = vmatprep.subr.mxu0 0.0
    %779 = vmatpush1.msra.mxu0 0.0
    %780 = vmatprep.subr.mxu0 0.0
    %781 = vmatpush1.msra.mxu0 0.0
    %782 = vmatprep.subr.mxu0 0.0
    %783 = vmatpush1.msra.mxu0 0.0
    %784 = vmatprep.subr.mxu0 0.0
    %785 = vmatpush1.msra.mxu0 0.0
    %786 = vmatprep.subr.mxu0 0.0
    %787 = vmatpush1.msra.mxu0 0.0
    %788 = vmatprep.subr.mxu0 0.0
    %789 = vmatpush1.msra.mxu0 0.0
    %790 = vmatprep.subr.mxu0 0.0
    %791 = vmatpush1.msra.mxu0 0.0
    %792 = vmatprep.subr.mxu0 0.0
    %793 = vmatpush1.msra.mxu0 0.0
    %794 = vmatprep.subr.mxu0 0.0
    %795 = vmatpush1.msra.mxu0 0.0
    %796 = vmatprep.subr.mxu0 0.0
    %797 = vmatpush1.msra.mxu0 0.0
    %798 = vmatprep.subr.mxu0 0.0
    %799 = vmatpush1.msra.mxu0 0.0
    %800 = vmatprep.subr.mxu0 0.0
    %801 = vmatpush1.msra.mxu0 0.0
    %802 = vmatprep.subr.mxu0 0.0
    %803 = vmatpush1.msra.mxu0 0.0
    %804 = vmatprep.subr.mxu0 0.0
    %805 = vmatpush1.msra.mxu0 0.0
    %806 = vmatprep.subr.mxu0 0.0
    %807 = vmatpush1.msra.mxu0 0.0
    %808 = vmatprep.subr.mxu0 0.0
    %809 = vmatpush1.msra.mxu0 0.0
    %810 = vmatprep.subr.mxu0 0.0
    %811 = vmatpush1.msra.mxu0 0.0
    %812 = vmatprep.subr.mxu0 0.0
    %813 = vmatpush1.msra.mxu0 0.0
    %814 = vmatprep.subr.mxu0 0.0
    %815 = vmatpush1.msra.mxu0 0.0
    %816 = vmatprep.subr.mxu0 0.0
    %817 = vmatpush1.msra.mxu0 0.0
    %818 = vmatprep.subr.mxu0 0.0
    %819 = vmatpush1.msra.mxu0 0.0
    %820 = vmatprep.subr.mxu0 0.0
    %821 = vmatpush1.msra.mxu0 0.0
    %822 = vmatprep.subr.mxu0 0.0
    %823 = vmatpush1.msra.mxu0 0.0
    %824 = vmatprep.subr.mxu0 0.0
    %825 = vmatpush1.msra.mxu0 0.0
    %826 = vmatprep.subr.mxu0 0.0
    %827 = vmatpush1.msra.mxu0 0.0
    %828 = vmatprep.subr.mxu0 0.0
    %829 = vmatpush1.msra.mxu0 0.0
    %830 = vmatprep.subr.mxu0 0.0
    %831 = vmatpush1.msra.mxu0 0.0
    %832 = vmatprep.subr.mxu0 0.0
    %833 = vmatpush1.msra.mxu0 0.0
    %834 = vmatprep.subr.mxu0 0.0
    %835 = vmatpush1.msra.mxu0 0.0
    %836 = vmatprep.mubr.f32.mxu0 0.0
    %837 = vmatmul.mubr.f32.gmra.mrb[0].mxu0 %v766
    %v838 = vpop.f32.mrb[0].mxu0
    %v839 = vadd.f32 0.0, %v838
    %v840 = vpop.f32.mrb[0].mxu0
    %841 = vdwg.mxu0
    %v843 = vsel %vm764, %v744, 0
    %v846 = vsel %vm768, %v759, 0
    %848 = vmatprep.subr.mxu0 0.0
    %849 = vmatpush1.msra.mxu0 %v757
    %850 = vmatprep.subr.mxu0 0.0
    %851 = vmatpush1.msra.mxu0 %v758
    %852 = vmatprep.subr.mxu0 0.0
    %853 = vmatpush1.msra.mxu0 %v846
    %854 = vmatprep.subr.mxu0 0.0
    %855 = vmatpush1.msra.mxu0 0.0
    %856 = vmatprep.subr.mxu0 0.0
    %857 = vmatpush1.msra.mxu0 0.0
    %858 = vmatprep.subr.mxu0 0.0
    %859 = vmatpush1.msra.mxu0 0.0
    %860 = vmatprep.subr.mxu0 0.0
    %861 = vmatpush1.msra.mxu0 0.0
    %862 = vmatprep.subr.mxu0 0.0
    %863 = vmatpush1.msra.mxu0 0.0
    %864 = vmatprep.subr.mxu0 0.0
    %865 = vmatpush1.msra.mxu0 0.0
    %866 = vmatprep.subr.mxu0 0.0
    %867 = vmatpush1.msra.mxu0 0.0
    %868 = vmatprep.subr.mxu0 0.0
    %869 = vmatpush1.msra.mxu0 0.0
    %870 = vmatprep.subr.mxu0 0.0
    %871 = vmatpush1.msra.mxu0 0.0
    %872 = vmatprep.subr.mxu0 0.0
    %873 = vmatpush1.msra.mxu0 0.0
    %874 = vmatprep.subr.mxu0 0.0
    %875 = vmatpush1.msra.mxu0 0.0
    %876 = vmatprep.subr.mxu0 0.0
    %877 = vmatpush1.msra.mxu0 0.0
    %878 = vmatprep.subr.mxu0 0.0
    %879 = vmatpush1.msra.mxu0 0.0
    %880 = vmatprep.subr.mxu0 0.0
    %881 = vmatpush1.msra.mxu0 0.0
    %882 = vmatprep.subr.mxu0 0.0
    %883 = vmatpush1.msra.mxu0 0.0
    %884 = vmatprep.subr.mxu0 0.0
    %885 = vmatpush1.msra.mxu0 0.0
    %886 = vmatprep.subr.mxu0 0.0
    %887 = vmatpush1.msra.mxu0 0.0
    %888 = vmatprep.subr.mxu0 0.0
    %889 = vmatpush1.msra.mxu0 0.0
    %890 = vmatprep.subr.mxu0 0.0
    %891 = vmatpush1.msra.mxu0 0.0
    %892 = vmatprep.subr.mxu0 0.0
    %893 = vmatpush1.msra.mxu0 0.0
    %894 = vmatprep.subr.mxu0 0.0
    %895 = vmatpush1.msra.mxu0 0.0
    %896 = vmatprep.subr.mxu0 0.0
    %897 = vmatpush1.msra.mxu0 0.0
    %898 = vmatprep.subr.mxu0 0.0
    %899 = vmatpush1.msra.mxu0 0.0
    %900 = vmatprep.subr.mxu0 0.0
    %901 = vmatpush1.msra.mxu0 0.0
    %902 = vmatprep.subr.mxu0 0.0
    %903 = vmatpush1.msra.mxu0 0.0
    %904 = vmatprep.subr.mxu0 0.0
    %905 = vmatpush1.msra.mxu0 0.0
    %906 = vmatprep.subr.mxu0 0.0
    %907 = vmatpush1.msra.mxu0 0.0
    %908 = vmatprep.subr.mxu0 0.0
    %909 = vmatpush1.msra.mxu0 0.0
    %910 = vmatprep.subr.mxu0 0.0
    %911 = vmatpush1.msra.mxu0 0.0
    %912 = vmatprep.mubr.f32.mxu0 0.0
    %913 = vmatmul.mubr.f32.gmra.mrb[0].mxu0 %v843
    %v914 = vpop.f32.mrb[0].mxu0
    %v915 = vadd.f32 %v839, %v914
    %v916 = vpop.f32.mrb[0].mxu0
    %917 = vdwg.mxu0
    %s918 = scalar_lea.vmem [#allocation7], 48
    %v919 = vld [vmem:[%s918] sm:$0xff]
    %v920 = vld [vmem:[%s918 + $0x8] sm:$0xff]
    %v921 = vld [vmem:[%s918 + $0x10] sm:$0x3]
    %v923 = vsel %vm764, %v754, 0
    %v926 = vsel %vm768, %v921, 0
    %928 = vmatprep.subr.mxu0 0.0
    %929 = vmatpush1.msra.mxu0 %v919
    %930 = vmatprep.subr.mxu0 0.0
    %931 = vmatpush1.msra.mxu0 %v920
    %932 = vmatprep.subr.mxu0 0.0
    %933 = vmatpush1.msra.mxu0 %v926
    %934 = vmatprep.subr.mxu0 0.0
    %935 = vmatpush1.msra.mxu0 0.0
    %936 = vmatprep.subr.mxu0 0.0
    %937 = vmatpush1.msra.mxu0 0.0
    %938 = vmatprep.subr.mxu0 0.0
    %939 = vmatpush1.msra.mxu0 0.0
    %940 = vmatprep.subr.mxu0 0.0
    %941 = vmatpush1.msra.mxu0 0.0
    %942 = vmatprep.subr.mxu0 0.0
    %943 = vmatpush1.msra.mxu0 0.0
    %944 = vmatprep.subr.mxu0 0.0
    %945 = vmatpush1.msra.mxu0 0.0
    %946 = vmatprep.subr.mxu0 0.0
    %947 = vmatpush1.msra.mxu0 0.0
    %948 = vmatprep.subr.mxu0 0.0
    %949 = vmatpush1.msra.mxu0 0.0
    %950 = vmatprep.subr.mxu0 0.0
    %951 = vmatpush1.msra.mxu0 0.0
    %952 = vmatprep.subr.mxu0 0.0
    %953 = vmatpush1.msra.mxu0 0.0
    %954 = vmatprep.subr.mxu0 0.0
    %955 = vmatpush1.msra.mxu0 0.0
    %956 = vmatprep.subr.mxu0 0.0
    %957 = vmatpush1.msra.mxu0 0.0
    %958 = vmatprep.subr.mxu0 0.0
    %959 = vmatpush1.msra.mxu0 0.0
    %960 = vmatprep.subr.mxu0 0.0
    %961 = vmatpush1.msra.mxu0 0.0
    %962 = vmatprep.subr.mxu0 0.0
    %963 = vmatpush1.msra.mxu0 0.0
    %964 = vmatprep.subr.mxu0 0.0
    %965 = vmatpush1.msra.mxu0 0.0
    %966 = vmatprep.subr.mxu0 0.0
    %967 = vmatpush1.msra.mxu0 0.0
    %968 = vmatprep.subr.mxu0 0.0
    %969 = vmatpush1.msra.mxu0 0.0
    %970 = vmatprep.subr.mxu0 0.0
    %971 = vmatpush1.msra.mxu0 0.0
    %972 = vmatprep.subr.mxu0 0.0
    %973 = vmatpush1.msra.mxu0 0.0
    %974 = vmatprep.subr.mxu0 0.0
    %975 = vmatpush1.msra.mxu0 0.0
    %976 = vmatprep.subr.mxu0 0.0
    %977 = vmatpush1.msra.mxu0 0.0
    %978 = vmatprep.subr.mxu0 0.0
    %979 = vmatpush1.msra.mxu0 0.0
    %980 = vmatprep.subr.mxu0 0.0
    %981 = vmatpush1.msra.mxu0 0.0
    %982 = vmatprep.subr.mxu0 0.0
    %983 = vmatpush1.msra.mxu0 0.0
    %984 = vmatprep.subr.mxu0 0.0
    %985 = vmatpush1.msra.mxu0 0.0
    %986 = vmatprep.subr.mxu0 0.0
    %987 = vmatpush1.msra.mxu0 0.0
    %988 = vmatprep.subr.mxu0 0.0
    %989 = vmatpush1.msra.mxu0 0.0
    %990 = vmatprep.subr.mxu0 0.0
    %991 = vmatpush1.msra.mxu0 0.0
    %992 = vmatprep.mubr.f32.mxu0 0.0
    %993 = vmatmul.mubr.f32.gmra.mrb[0].mxu0 %v923
    %v994 = vpop.f32.mrb[0].mxu0
    %v995 = vadd.f32 0.0, %v994
    %v996 = vpop.f32.mrb[0].mxu0
    %997 = vdwg.mxu0
    %v998 = vadd.f32 %v915, %v995
    %v999 = vld [vmem:[%s4] sm:$0xff]
    %1001 = vset.pattern.permute.xlu0 0
    %1002 = vperm.xlu0 %1001, %v999
    %v1003 = vpop.permute.xlu0 %1002
    %v1005 = vadd.f32 %v998, %v1003
    %v1006 = vmax.f32 %v1005, 0.0
    %vm1007 = vcmask 113664
    %1008 = vst.msk [vmem:[%s8] sm:$0xff] %vm1007, %v1006
    // Predicated region
    $region50: #{cnn_forward.1} parent=1 // pred_check
      _
    $region51: #{cnn_forward.1} parent=1 // pred_check_branch
      %1010 = sbr.rel (0) target = $region53
    $region52: #{cnn_forward.1} parent=1 // pred_region
      _
    $region53: #{cnn_forward.1} parent=1 // pred_fallthru
      _
    // Predicated region
    $region54: #{cnn_forward.1} parent=1 // pred_check
      _
    $region55: #{cnn_forward.1} parent=1 // pred_check_branch
      %1012 = sbr.rel (0) target = $region57
    $region56: #{cnn_forward.1} parent=1 // pred_region
      _
    $region57: #{cnn_forward.1} parent=1 // pred_fallthru
      _
    %1013 = vsyncpa [#allocation3], 1
    %1014 = vsyncpa [#allocation5], 1
    %1015 = vsyncpa [#allocation8], 1

</llo_original>
